<compile_context>
chip_gen: v7x
topology: tpu7x:2x2x1
jax: 0.10.0
libtpu: 0.0.40
codegen_flags: <defaults>
</compile_context>

<pallas_src>
import functools

import jax
import jax.numpy as jnp
from jax.experimental import pallas as pl
from jax.experimental.pallas import tpu as pltpu


def _round_up(x, mult):
    return ((x + mult - 1) // mult) * mult


def _pick_tile_m(m, tile_m):
    """Pick a lane-axis tile (multiple of 128), keeping >=2 grid steps when
    m allows so v7x's two TensorCores both get work."""
    if tile_m is None:
        tile_m = 2048
    tile_m = max(128, min(_round_up(tile_m, 128), _round_up(m, 128)))
    if m > 128 and pl.cdiv(m, tile_m) < 2:
        tile_m = max(128, _round_up(pl.cdiv(m, 2), 128))
    return tile_m


def _fused_mlp_tanh_kernel(x_ref, *refs):
    """Chained tanh(W_i @ h + b_i) over all layers for one node-lane tile.

    Lane-dense layout: activations are (features, tile_m) with the node axis on
    the 128-lane axis. refs = (w0, b0, w1, b1, ..., o_ref). The activation `h`
    stays in vregs between layers (no HBM round trips).
    """
    o_ref = refs[-1]
    wb_refs = refs[:-1]
    n_layers = len(wb_refs) // 2

    h = x_ref[...]                                   # (in_f, tile_m)
    for i in range(n_layers):                        # static unroll over layers
        w = wb_refs[2 * i][...]                      # (out_i, in_i) PyTorch layout
        b = wb_refs[2 * i + 1][...]                  # (out_i, 1): lane broadcast is free
        y = jnp.dot(w, h, preferred_element_type=jnp.float32) + b
        h = jnp.tanh(y)
    o_ref[...] = h.astype(o_ref.dtype)


def fused_mlp_tanh_t(x_t, params, *, tile_m=None):
    """x_t: (in_f, m) feature-major activations; params: list of
    (W (out, in), b (out,)) in PyTorch layout. Returns (out_last, m).

    One pallas_call for the whole stack, tiled over the node (lane) axis.
    Weights/biases are VMEM-resident across the grid (constant index_maps).
    """
    in_f, m = x_t.shape
    out_f = params[-1][0].shape[0]

    # Only pad when m < 128 (lane block must be a multiple of 128); otherwise
    # let Pallas handle the partial last block via write masking.
    m_eff = m
    if m < 128:
        x_t = jnp.pad(x_t, ((0, 0), (0, 128 - m)))
        m_eff = 128

    tile = _pick_tile_m(m_eff, tile_m)
    grid = (pl.cdiv(m_eff, tile),)

    in_specs = [pl.BlockSpec((in_f, tile), lambda i: (0, i))]
    flat_inputs = [x_t]
    for w, b in params:
        n_out, n_in = w.shape
        # Parameters: full-array blocks, same block index every grid step
        # (stay resident in VMEM across the whole node sweep).
        in_specs.append(pl.BlockSpec((n_out, n_in), lambda i: (0, 0)))
        in_specs.append(pl.BlockSpec((n_out, 1), lambda i: (0, 0)))
        flat_inputs.append(w)
        flat_inputs.append(b.reshape(n_out, 1))

    out_spec = pl.BlockSpec((out_f, tile), lambda i: (0, i))

    flops = 2 * m * sum(w.shape[0] * w.shape[1] for w, _ in params)
    transcendentals = m * sum(w.shape[0] for w, _ in params)
    bytes_accessed = 4 * (m * in_f + m * out_f
                          + sum(int(w.size) + int(b.size) for w, b in params))

    out_t = pl.pallas_call(
        _fused_mlp_tanh_kernel,
        out_shape=jax.ShapeDtypeStruct((out_f, m_eff), x_t.dtype),
        grid=grid,
        in_specs=in_specs,
        out_specs=out_spec,
        compiler_params=pltpu.CompilerParams(
            # Node tiles are independent -> parallel (lets v7x split across TCs).
            dimension_semantics=("parallel",),
        ),
        cost_estimate=pl.CostEstimate(
            flops=flops,
            transcendentals=transcendentals,
            bytes_accessed=bytes_accessed,
        ),
    )(*flat_inputs)

    return out_t[:, :m] if m_eff != m else out_t


def init_module3_params(key, input_features, layer_sizes, dtype=jnp.float32):
    """Deterministic params for the stack of Linear layers.

    Each layer i: weight (out_i, in_i) [PyTorch-native layout], bias (out_i,).
    """
    params = []
    in_f = input_features
    for out_f in layer_sizes:
        key, kw, kb = jax.random.split(key, 3)
        bound = 1.0 / (in_f ** 0.5)          # matches nn.Linear default init range
        w = jax.random.uniform(kw, (out_f, in_f), dtype, -bound, bound)
        b = jax.random.uniform(kb, (out_f,), dtype, -bound, bound)
        params.append((w, b))
        in_f = out_f
    return params


@functools.partial(jax.jit, static_argnames=("tile_m",))
def module3_forward(x, params, tile_m=None):
    """Module3 forward: tanh(Linear(...)) chained over all layers, fused into a
    single Pallas kernel operating in a lane-dense (features, nodes) layout.

    Interface matches the PyTorch module: x (m, p*Q) -> (m, layer_sizes[-1]).
    """
    # TODO(synk): fuse this head into the Module2 producer kernel (emit its
    # output already feature-major) so the (m, p*Q) activation never leaves
    # VMEM and the boundary transposes disappear.
    out_t = fused_mlp_tanh_t(x.T, params, tile_m=tile_m)
    return out_t.T


if __name__ == "__main__":
    # Small shapes consistent with the module: m graph nodes, p*Q input features.
    m, p, Q = 256, 4, 8                 # input_features = 32
    layer_sizes = [32, 16]              # args.module_3_layer_sizes

    key = jax.random.PRNGKey(0)
    kx, kp = jax.random.split(key)
    x = jax.random.normal(kx, (m, p * Q), dtype=jnp.float32)

    params = init_module3_params(kp, p * Q, layer_sizes)

    # Default tile picker gives tile_m=128 -> grid=(2,): exercises the
    # multi-step, weights-resident, lane-dense path.
    out = module3_forward(x, params)
    jax.block_until_ready(out)

    # Reference check in plain JAX (PyTorch semantics: x @ W.T + b, then tanh).
    ref = x
    for w, b in params:
        ref = jnp.tanh(ref @ w.T + b)
    assert out.shape == (m, layer_sizes[-1])
    assert jnp.allclose(out, ref, atol=1e-5, rtol=1e-5)

    print("KERNEL_OK")
</pallas_src>

<mosaic_0001>
module attributes {stable_mosaic.version = 11 : i64} {
  func.func @_fused_mlp_tanh_kernel(%arg0: i32, %arg1: memref<32x128xf32, #tpu.memory_space<vmem>>, %arg2: memref<32x32xf32, #tpu.memory_space<vmem>>, %arg3: memref<32x1xf32, #tpu.memory_space<vmem>>, %arg4: memref<16x32xf32, #tpu.memory_space<vmem>>, %arg5: memref<16x1xf32, #tpu.memory_space<vmem>>, %arg6: memref<16x128xf32, #tpu.memory_space<vmem>>) attributes {dimension_semantics = [#tpu.dimension_semantics<parallel>], iteration_bounds = array<i64: 2>, scalar_prefetch = 0 : i64, scratch_operands = 0 : i64, tpu.core_type = #tpu.core_type<tc>, window_params = [{transform_indices = @transform_0, window_bounds = array<i64: 32, 128>}, {pipeline_mode = #tpu.pipeline_mode<synchronous>, transform_indices = @transform_1, window_bounds = array<i64: 32, 32>}, {pipeline_mode = #tpu.pipeline_mode<synchronous>, transform_indices = @transform_2, window_bounds = array<i64: 32, 1>}, {pipeline_mode = #tpu.pipeline_mode<synchronous>, transform_indices = @transform_3, window_bounds = array<i64: 16, 32>}, {pipeline_mode = #tpu.pipeline_mode<synchronous>, transform_indices = @transform_4, window_bounds = array<i64: 16, 1>}, {transform_indices = @transform_5, window_bounds = array<i64: 16, 128>}]} {
    %c0 = arith.constant 0 : index
    %c0_0 = arith.constant 0 : index
    %0 = vector.load %arg1[%c0, %c0_0] : memref<32x128xf32, #tpu.memory_space<vmem>>, vector<32x128xf32>
    %c0_1 = arith.constant 0 : index
    %c0_2 = arith.constant 0 : index
    %1 = vector.load %arg2[%c0_1, %c0_2] : memref<32x32xf32, #tpu.memory_space<vmem>>, vector<32x32xf32>
    %c0_3 = arith.constant 0 : index
    %c0_4 = arith.constant 0 : index
    %2 = vector.load %arg3[%c0_3, %c0_4] : memref<32x1xf32, #tpu.memory_space<vmem>>, vector<32x1xf32>
    %cst = arith.constant dense<0.000000e+00> : vector<32x128xf32>
    %3 = tpu.matmul %1, %0, %cst {dimension_numbers = #tpu.dot_dimension_numbers<[1], [0], [0], [1], [0, 0, 1, 1], [], []>} : vector<32x32xf32>, vector<32x128xf32>, vector<32x128xf32> -> vector<32x128xf32>
    %4 = vector.broadcast %2 : vector<32x1xf32> to vector<32x128xf32>
    %5 = arith.addf %3, %4 : vector<32x128xf32>
    %6 = math.tanh %5 : vector<32x128xf32>
    %c0_5 = arith.constant 0 : index
    %c0_6 = arith.constant 0 : index
    %7 = vector.load %arg4[%c0_5, %c0_6] : memref<16x32xf32, #tpu.memory_space<vmem>>, vector<16x32xf32>
    %c0_7 = arith.constant 0 : index
    %c0_8 = arith.constant 0 : index
    %8 = vector.load %arg5[%c0_7, %c0_8] : memref<16x1xf32, #tpu.memory_space<vmem>>, vector<16x1xf32>
    %cst_9 = arith.constant dense<0.000000e+00> : vector<16x128xf32>
    %9 = tpu.matmul %7, %6, %cst_9 {dimension_numbers = #tpu.dot_dimension_numbers<[1], [0], [0], [1], [0, 0, 1, 1], [], []>} : vector<16x32xf32>, vector<32x128xf32>, vector<16x128xf32> -> vector<16x128xf32>
    %10 = vector.broadcast %8 : vector<16x1xf32> to vector<16x128xf32>
    %11 = arith.addf %9, %10 : vector<16x128xf32>
    %12 = math.tanh %11 : vector<16x128xf32>
    %c0_10 = arith.constant 0 : index
    %c0_11 = arith.constant 0 : index
    %13 = vector.load %arg6[%c0_10, %c0_11] : memref<16x128xf32, #tpu.memory_space<vmem>>, vector<16x128xf32>
    tpu.vector_store %arg6[%c0_10, %c0_11], %12 {strides = array<i32>} : memref<16x128xf32, #tpu.memory_space<vmem>>, vector<16x128xf32>,
    return
  }
  func.func @transform_0(%arg0: i32) -> (i32, i32) {
    %c0_i32 = arith.constant 0 : i32
    %c0_i32_0 = arith.constant 0 : i32
    return %c0_i32, %arg0 : i32, i32
  }
  func.func @transform_1(%arg0: i32) -> (i32, i32) {
    %c0_i32 = arith.constant 0 : i32
    %c0_i32_0 = arith.constant 0 : i32
    %c0_i32_1 = arith.constant 0 : i32
    return %c0_i32, %c0_i32_0 : i32, i32
  }
  func.func @transform_2(%arg0: i32) -> (i32, i32) {
    %c0_i32 = arith.constant 0 : i32
    %c0_i32_0 = arith.constant 0 : i32
    %c0_i32_1 = arith.constant 0 : i32
    return %c0_i32, %c0_i32_0 : i32, i32
  }
  func.func @transform_3(%arg0: i32) -> (i32, i32) {
    %c0_i32 = arith.constant 0 : i32
    %c0_i32_0 = arith.constant 0 : i32
    %c0_i32_1 = arith.constant 0 : i32
    return %c0_i32, %c0_i32_0 : i32, i32
  }
  func.func @transform_4(%arg0: i32) -> (i32, i32) {
    %c0_i32 = arith.constant 0 : i32
    %c0_i32_0 = arith.constant 0 : i32
    %c0_i32_1 = arith.constant 0 : i32
    return %c0_i32, %c0_i32_0 : i32, i32
  }
  func.func @transform_5(%arg0: i32) -> (i32, i32) {
    %c0_i32 = arith.constant 0 : i32
    %c0_i32_0 = arith.constant 0 : i32
    return %c0_i32, %arg0 : i32, i32
  }
}

</mosaic_0001>

<llo_original>
// kernel: module3_forward.1
$region0: #{module3_forward.1}
  #allocation0 [shape = 'u32[]', space=smem, size = 0x4, offset = 0x4, fixed_abs, tag = 'smem constant byte address 0x4 - core index']
  #allocation1 [shape = 'u32[144,128]{1,0:T(1,128)}', space=vmem, size = 0x12000, scoped, tag = 'internal scratch']
  %s0 = inlined_call_operand.hbm [shape: f32[32,256], index: 0, kind: input, shape index: {}]
  %s1 = inlined_call_operand.vmem [shape: f32[32,32], index: 1, kind: input, shape index: {}]
  %s2 = inlined_call_operand.vmem [shape: f32[32,1], index: 2, kind: input, shape index: {}]
  %s3 = inlined_call_operand.vmem [shape: f32[16,32], index: 3, kind: input, shape index: {}]
  %s4 = inlined_call_operand.vmem [shape: f32[16,1], index: 4, kind: input, shape index: {}]
  %s5 = inlined_call_operand.hbm [shape: f32[16,256], index: 5, kind: output, shape index: {}]
  %s6 = sld [smem:[#allocation0]]
  $region57: #{module3_forward.1} parent=0
    _
  %s8 = ssub.s32 1, %s6
  %s9 = scalar_select 0, %s8, %s6
  $region1: #{module3_forward.1} parent=0
    #allocation2 [shape = 'u8[32768]{0}', space=vmem, size = 0x8000, scoped, tag = 'input window, operand 0']
    #allocation3 [shape = 's32[2]{0}', space=sflag, size = 0x8, scoped, tag = 'scoped memory for module3_forward.1']
    #allocation4 [shape = 's32[2]{0}', space=sflag, size = 0x8, scoped, tag = 'scoped memory for module3_forward.1']
    #allocation5 [shape = 'u8[16384]{0}', space=vmem, size = 0x4000, scoped, tag = 'output window, operand 0']
    %10 = vsyncpa [#allocation3], 0
    %s11 = scalar_lea.sflag [#allocation3], 1
    %12 = vsyncpa %s11, 0
    %13 = vsyncpa [#allocation4], 0
    %s14 = scalar_lea.sflag [#allocation4], 1
    %15 = vsyncpa %s14, 0
    loop: start=0, step=1, limit=4
    $region2: #{module3_forward.1} parent=1 // loop_pre_header
      _
    $region3: #{module3_forward.1} parent=1 // loop_header
      %s17 = sphi 0, %s21
      %p18 = scmp.ge.s32.totalorder %s17, 4
      %s27 = sphi 0, %s29
      %s30 = sphi 0, %s27
      %s31 = sphi 0, %s30
      %s47 = sphi 0, %s31
      %s51 = sphi 0, %s51
      %s53 = sphi 0, %s51
      %s54 = sphi 0, %s53
      %s68 = sphi 0, %s54
      %s72 = sphi 0, %s72
      %s74 = sphi 0, %s72
      %s75 = sphi 0, %s74
      %s89 = sphi 0, %s75
      %s93 = sphi 0, %s93
      %s95 = sphi 0, %s93
      %s96 = sphi 0, %s95
      %s110 = sphi 0, %s96
      %s114 = sphi 0, %s114
      %s116 = sphi 0, %s114
      %s117 = sphi 0, %s116
      %s131 = sphi 0, %s117
      %s137 = sphi 0, %s139
      %s140 = sphi 0, %s137
      %s141 = sphi 0, %s140
      %s157 = sphi 0, %s141
    $region4: #{module3_forward.1} parent=1 // loop_header_branch
      %20 = sbr.rel (%p18) target = $region8
    $region5: #{module3_forward.1} parent=1 // loop_body
      %s22 = ssub.s32 %s17, 1
      %s23 = ssub.s32 %s17, 2
      %s24 = sadd.s32 %s17, 1
      %s25 = ssub.s32 %s17, %s24
      %p26 = scmp.eq.s32.totalorder %s25, 0
      %s28 = sadd.s32 %s27, 1
      %s29 = scalar_select %p26, %s27, %s28
      %p32 = pneg %p26
      %p33 = scmp.eq.s32.totalorder %s17, 1
      %p34 = por %p32, %p33
      %p35 = scmp.ne.s32.totalorder %s27, %s30
      %p36 = scmp.eq.s32.totalorder %s17, 0
      %p37 = por %p35, %p36
      %p38 = scmp.ne.s32.totalorder %s27, %s30
      %p39 = scmp.eq.s32.totalorder %s22, 1
      %p40 = por %p38, %p39
      %p41 = scmp.ne.s32.totalorder %s30, %s31
      %p42 = scmp.eq.s32.totalorder %s22, 0
      %p43 = por %p41, %p42
      %p44 = scmp.ne.s32.totalorder %s30, %s31
      %p45 = scmp.eq.s32.totalorder %s23, 1
      %p46 = por %p44, %p45
      %p48 = scmp.ne.s32.totalorder %s31, %s47
      %p49 = scmp.eq.s32.totalorder %s23, 0
      %p50 = por %p48, %p49
      %s52 = sadd.s32 %s51, 1
      %p55 = scmp.eq.s32.totalorder %s17, 1
      %p56 = scmp.ne.s32.totalorder %s51, %s53
      %p57 = scmp.eq.s32.totalorder %s17, 0
      %p58 = por %p56, %p57
      %p59 = scmp.ne.s32.totalorder %s51, %s53
      %p60 = scmp.eq.s32.totalorder %s22, 1
      %p61 = por %p59, %p60
      %p62 = scmp.ne.s32.totalorder %s53, %s54
      %p63 = scmp.eq.s32.totalorder %s22, 0
      %p64 = por %p62, %p63
      %p65 = scmp.ne.s32.totalorder %s53, %s54
      %p66 = scmp.eq.s32.totalorder %s23, 1
      %p67 = por %p65, %p66
      %p69 = scmp.ne.s32.totalorder %s54, %s68
      %p70 = scmp.eq.s32.totalorder %s23, 0
      %p71 = por %p69, %p70
      %s73 = sadd.s32 %s72, 1
      %p76 = scmp.eq.s32.totalorder %s17, 1
      %p77 = scmp.ne.s32.totalorder %s72, %s74
      %p78 = scmp.eq.s32.totalorder %s17, 0
      %p79 = por %p77, %p78
      %p80 = scmp.ne.s32.totalorder %s72, %s74
      %p81 = scmp.eq.s32.totalorder %s22, 1
      %p82 = por %p80, %p81
      %p83 = scmp.ne.s32.totalorder %s74, %s75
      %p84 = scmp.eq.s32.totalorder %s22, 0
      %p85 = por %p83, %p84
      %p86 = scmp.ne.s32.totalorder %s74, %s75
      %p87 = scmp.eq.s32.totalorder %s23, 1
      %p88 = por %p86, %p87
      %p90 = scmp.ne.s32.totalorder %s75, %s89
      %p91 = scmp.eq.s32.totalorder %s23, 0
      %p92 = por %p90, %p91
      %s94 = sadd.s32 %s93, 1
      %p97 = scmp.eq.s32.totalorder %s17, 1
      %p98 = scmp.ne.s32.totalorder %s93, %s95
      %p99 = scmp.eq.s32.totalorder %s17, 0
      %p100 = por %p98, %p99
      %p101 = scmp.ne.s32.totalorder %s93, %s95
      %p102 = scmp.eq.s32.totalorder %s22, 1
      %p103 = por %p101, %p102
      %p104 = scmp.ne.s32.totalorder %s95, %s96
      %p105 = scmp.eq.s32.totalorder %s22, 0
      %p106 = por %p104, %p105
      %p107 = scmp.ne.s32.totalorder %s95, %s96
      %p108 = scmp.eq.s32.totalorder %s23, 1
      %p109 = por %p107, %p108
      %p111 = scmp.ne.s32.totalorder %s96, %s110
      %p112 = scmp.eq.s32.totalorder %s23, 0
      %p113 = por %p111, %p112
      %s115 = sadd.s32 %s114, 1
      %p118 = scmp.eq.s32.totalorder %s17, 1
      %p119 = scmp.ne.s32.totalorder %s114, %s116
      %p120 = scmp.eq.s32.totalorder %s17, 0
      %p121 = por %p119, %p120
      %p122 = scmp.ne.s32.totalorder %s114, %s116
      %p123 = scmp.eq.s32.totalorder %s22, 1
      %p124 = por %p122, %p123
      %p125 = scmp.ne.s32.totalorder %s116, %s117
      %p126 = scmp.eq.s32.totalorder %s22, 0
      %p127 = por %p125, %p126
      %p128 = scmp.ne.s32.totalorder %s116, %s117
      %p129 = scmp.eq.s32.totalorder %s23, 1
      %p130 = por %p128, %p129
      %p132 = scmp.ne.s32.totalorder %s117, %s131
      %p133 = scmp.eq.s32.totalorder %s23, 0
      %p134 = por %p132, %p133
      %s135 = ssub.s32 %s17, %s24
      %p136 = scmp.eq.s32.totalorder %s135, 0
      %s138 = sadd.s32 %s137, 1
      %s139 = scalar_select %p136, %s137, %s138
      %p142 = pneg %p136
      %p143 = scmp.eq.s32.totalorder %s17, 1
      %p144 = por %p142, %p143
      %p145 = scmp.ne.s32.totalorder %s137, %s140
      %p146 = scmp.eq.s32.totalorder %s17, 0
      %p147 = por %p145, %p146
      %p148 = scmp.ne.s32.totalorder %s137, %s140
      %p149 = scmp.eq.s32.totalorder %s22, 1
      %p150 = por %p148, %p149
      %p151 = scmp.ne.s32.totalorder %s140, %s141
      %p152 = scmp.eq.s32.totalorder %s22, 0
      %p153 = por %p151, %p152
      %p154 = scmp.ne.s32.totalorder %s140, %s141
      %p155 = scmp.eq.s32.totalorder %s23, 1
      %p156 = por %p154, %p155
      %p158 = scmp.ne.s32.totalorder %s141, %s157
      %p159 = scmp.eq.s32.totalorder %s23, 0
      %p160 = por %p158, %p159
      %p161 = scmp.le.s32.totalorder 1, %s17
      %p162 = scmp.lt.s32.totalorder %s17, 3
      %p163 = pnand %p161, %p162
      %p164 = pneg %p163
      // Predicated region
      $region9: #{module3_forward.1} parent=5 // pred_check
        _
      $region10: #{module3_forward.1} parent=5 // pred_check_branch
        %166 = sbr.rel (%p163) target = $region12
      $region11: #{module3_forward.1} parent=5 // pred_region
        %s167 = ssub.s32 %s17, 1
        // Predicated region
        $region13: #{module3_forward.1} parent=11 // pred_check
          %p168 = pneg %p64
        $region14: #{module3_forward.1} parent=11 // pred_check_branch
          %170 = sbr.rel (%p168) target = $region16
        $region15: #{module3_forward.1} parent=11 // pred_region
          _
        $region16: #{module3_forward.1} parent=11 // pred_fallthru
          _
        // Predicated region
        $region17: #{module3_forward.1} parent=11 // pred_check
          %p171 = pneg %p85
        $region18: #{module3_forward.1} parent=11 // pred_check_branch
          %173 = sbr.rel (%p171) target = $region20
        $region19: #{module3_forward.1} parent=11 // pred_region
          _
        $region20: #{module3_forward.1} parent=11 // pred_fallthru
          _
        // Predicated region
        $region21: #{module3_forward.1} parent=11 // pred_check
          %p174 = pneg %p106
        $region22: #{module3_forward.1} parent=11 // pred_check_branch
          %176 = sbr.rel (%p174) target = $region24
        $region23: #{module3_forward.1} parent=11 // pred_region
          _
        $region24: #{module3_forward.1} parent=11 // pred_fallthru
          _
        // Predicated region
        $region25: #{module3_forward.1} parent=11 // pred_check
          %p177 = pneg %p127
        $region26: #{module3_forward.1} parent=11 // pred_check_branch
          %179 = sbr.rel (%p177) target = $region28
        $region27: #{module3_forward.1} parent=11 // pred_region
          _
        $region28: #{module3_forward.1} parent=11 // pred_fallthru
          _
      $region12: #{module3_forward.1} parent=5 // pred_fallthru
        _
      %p180 = scmp.lt.s32.totalorder %s17, 2
      // Predicated region
      $region29: #{module3_forward.1} parent=5 // pred_check
        %p181 = pneg %p180
      $region30: #{module3_forward.1} parent=5 // pred_check_branch
        %183 = sbr.rel (%p181) target = $region32
      $region31: #{module3_forward.1} parent=5 // pred_region
        // Predicated region
        $region33: #{module3_forward.1} parent=31 // pred_check
          %p184 = pneg %p37
        $region34: #{module3_forward.1} parent=31 // pred_check_branch
          %186 = sbr.rel (%p184) target = $region36
        $region35: #{module3_forward.1} parent=31 // pred_region
          %s187 = sand.u32 %s27, 1
          %s188 = scalar_lea.sflag [#allocation3], %s187
          %s189 = sand.u32 %s27, 1
          %s190 = smul.addr %s189, 32
          %s191 = scalar_lea.vmem [#allocation2], %s190
          %s193 = ssub.s32 512, 512
          %194 = vsyncadd %s188, %s193
          %s195 = smul.addr %s17, 128
          %s196 = scalar_lea.hbm %s0, %s195
          %s197 = sshll.u32 %s191, 4
          %s198 = int_to_ptr.vmem [resolvable:$true] %s197
          %203 = dma.hbm_to_vmem [thread:$0]  %s196, 512, %s198, %s188, 256, 128, 8
        $region36: #{module3_forward.1} parent=31 // pred_fallthru
          _
      $region32: #{module3_forward.1} parent=5 // pred_fallthru
        _
      %p204 = scmp.le.s32.totalorder 1, %s17
      %p205 = scmp.lt.s32.totalorder %s17, 3
      %p206 = pnand %p204, %p205
      %p207 = pneg %p206
      // Predicated region
      $region37: #{module3_forward.1} parent=5 // pred_check
        _
      $region38: #{module3_forward.1} parent=5 // pred_check_branch
        %209 = sbr.rel (%p206) target = $region40
      $region39: #{module3_forward.1} parent=5 // pred_region
        %s210 = ssub.s32 %s17, 1
        %s211 = sand.u32 %s30, 1
        %s212 = scalar_lea.sflag [#allocation3], %s211
        %s213 = sand.u32 %s30, 1
        %s214 = smul.addr %s213, 32
        %s215 = scalar_lea.vmem [#allocation2], %s214
        // Predicated region
        $region41: #{module3_forward.1} parent=39 // pred_check
          %p216 = pneg %p43
        $region42: #{module3_forward.1} parent=39 // pred_check_branch
          %218 = sbr.rel (%p216) target = $region44
        $region43: #{module3_forward.1} parent=39 // pred_region
          %219 = dma.done %s212, 512
        $region44: #{module3_forward.1} parent=39 // pred_fallthru
          _
        %s220 = sand.u32 %s30, 1
        %s221 = scalar_lea.sflag [#allocation3], %s220
        %s222 = sand.u32 %s30, 1
        %s223 = smul.addr %s222, 32
        %s224 = scalar_lea.vmem [#allocation2], %s223
        %p225 = pneg %p43
        %p226 = pneg %p40
        %p227 = pneg %p64
        %p228 = pneg %p61
        %p229 = pneg %p85
        %p230 = pneg %p82
        %p231 = pneg %p106
        %p232 = pneg %p103
        %p233 = pneg %p127
        %p234 = pneg %p124
        %p235 = pneg %p153
        %p236 = pneg %p150
        %s237 = sand.u32 %s140, 1
        %s238 = scalar_lea.sflag [#allocation4], %s237
        %s239 = sand.u32 %s140, 1
        %s240 = smul.addr %s239, 16
        %s241 = scalar_lea.vmem [#allocation5], %s240
        %v242 = vld [vmem:[%s215] sm:$0xff]
        %v243 = vld [vmem:[%s215 + $0x8] sm:$0xff]
        %v244 = vld [vmem:[%s215 + $0x10] sm:$0xff]
        %v245 = vld [vmem:[%s215 + $0x18] sm:$0xff]
        %v246 = vld [vmem:[%s1] sm:$0xff]
        %v247 = vld [vmem:[%s1 + $0x8] sm:$0xff]
        %v248 = vld [vmem:[%s1 + $0x10] sm:$0xff]
        %v249 = vld [vmem:[%s1 + $0x18] sm:$0xff]
        %v250 = vld [vmem:[%s2] sm:$0xff]
        %v251 = vld [vmem:[%s2 + $0x8] sm:$0xff]
        %v252 = vld [vmem:[%s2 + $0x10] sm:$0xff]
        %v253 = vld [vmem:[%s2 + $0x18] sm:$0xff]
        %255 = vset.pattern.permute.xlu0 0
        %256 = vperm.xlu0 %255, %v250
        %v257 = vpop.permute.xlu0 %256
        %260 = vset.pattern.permute.xlu0 0
        %261 = vperm.xlu0 %260, %v251
        %v262 = vpop.permute.xlu0 %261
        %265 = vset.pattern.permute.xlu0 0
        %266 = vperm.xlu0 %265, %v252
        %v267 = vpop.permute.xlu0 %266
        %270 = vset.pattern.permute.xlu0 0
        %271 = vperm.xlu0 %270, %v253
        %v272 = vpop.permute.xlu0 %271
        %vm274 = vcmask 261120
        %v276 = vsel %vm274, %v246, 0
        %v279 = vsel %vm274, %v247, 0
        %v282 = vsel %vm274, %v248, 0
        %v285 = vsel %vm274, %v249, 0
        %287 = vmatprep.subr.mxu0 0.0
        %288 = vmatpush1.msra.mxu0 %v242
        %289 = vmatprep.subr.mxu0 0.0
        %290 = vmatpush1.msra.mxu0 %v243
        %291 = vmatprep.subr.mxu0 0.0
        %292 = vmatpush1.msra.mxu0 %v244
        %293 = vmatprep.subr.mxu0 0.0
        %294 = vmatpush1.msra.mxu0 %v245
        %295 = vmatprep.subr.mxu0 0.0
        %296 = vmatpush1.msra.mxu0 0.0
        %297 = vmatprep.subr.mxu0 0.0
        %298 = vmatpush1.msra.mxu0 0.0
        %299 = vmatprep.subr.mxu0 0.0
        %300 = vmatpush1.msra.mxu0 0.0
        %301 = vmatprep.subr.mxu0 0.0
        %302 = vmatpush1.msra.mxu0 0.0
        %303 = vmatprep.subr.mxu0 0.0
        %304 = vmatpush1.msra.mxu0 0.0
        %305 = vmatprep.subr.mxu0 0.0
        %306 = vmatpush1.msra.mxu0 0.0
        %307 = vmatprep.subr.mxu0 0.0
        %308 = vmatpush1.msra.mxu0 0.0
        %309 = vmatprep.subr.mxu0 0.0
        %310 = vmatpush1.msra.mxu0 0.0
        %311 = vmatprep.subr.mxu0 0.0
        %312 = vmatpush1.msra.mxu0 0.0
        %313 = vmatprep.subr.mxu0 0.0
        %314 = vmatpush1.msra.mxu0 0.0
        %315 = vmatprep.subr.mxu0 0.0
        %316 = vmatpush1.msra.mxu0 0.0
        %317 = vmatprep.subr.mxu0 0.0
        %318 = vmatpush1.msra.mxu0 0.0
        %319 = vmatprep.subr.mxu0 0.0
        %320 = vmatpush1.msra.mxu0 0.0
        %321 = vmatprep.subr.mxu0 0.0
        %322 = vmatpush1.msra.mxu0 0.0
        %323 = vmatprep.subr.mxu0 0.0
        %324 = vmatpush1.msra.mxu0 0.0
        %325 = vmatprep.subr.mxu0 0.0
        %326 = vmatpush1.msra.mxu0 0.0
        %327 = vmatprep.subr.mxu0 0.0
        %328 = vmatpush1.msra.mxu0 0.0
        %329 = vmatprep.subr.mxu0 0.0
        %330 = vmatpush1.msra.mxu0 0.0
        %331 = vmatprep.subr.mxu0 0.0
        %332 = vmatpush1.msra.mxu0 0.0
        %333 = vmatprep.subr.mxu0 0.0
        %334 = vmatpush1.msra.mxu0 0.0
        %335 = vmatprep.subr.mxu0 0.0
        %336 = vmatpush1.msra.mxu0 0.0
        %337 = vmatprep.subr.mxu0 0.0
        %338 = vmatpush1.msra.mxu0 0.0
        %339 = vmatprep.subr.mxu0 0.0
        %340 = vmatpush1.msra.mxu0 0.0
        %341 = vmatprep.subr.mxu0 0.0
        %342 = vmatpush1.msra.mxu0 0.0
        %343 = vmatprep.subr.mxu0 0.0
        %344 = vmatpush1.msra.mxu0 0.0
        %345 = vmatprep.subr.mxu0 0.0
        %346 = vmatpush1.msra.mxu0 0.0
        %347 = vmatprep.subr.mxu0 0.0
        %348 = vmatpush1.msra.mxu0 0.0
        %349 = vmatprep.subr.mxu0 0.0
        %350 = vmatpush1.msra.mxu0 0.0
        %351 = vmatprep.mubr.f32.mxu0 0.0
        %352 = vmatmul.mubr.f32.gmra.mrb[0].mxu0 %v276
        %v353 = vpop.f32.mrb[0].mxu0
        %v354 = vadd.f32 %v257, %v353
        %v355 = vpop.f32.mrb[0].mxu0
        %356 = vmatprep.mubr.f32.mxu0 0.0
        %357 = vmatmul.mubr.f32.gmra.mrb[0].mxu0 %v279
        %v358 = vpop.f32.mrb[0].mxu0
        %v359 = vadd.f32 %v262, %v358
        %v360 = vpop.f32.mrb[0].mxu0
        %361 = vmatprep.mubr.f32.mxu0 0.0
        %362 = vmatmul.mubr.f32.gmra.mrb[0].mxu0 %v282
        %v363 = vpop.f32.mrb[0].mxu0
        %v364 = vadd.f32 %v267, %v363
        %v365 = vpop.f32.mrb[0].mxu0
        %366 = vmatprep.mubr.f32.mxu0 0.0
        %367 = vmatmul.mubr.f32.gmra.mrb[0].mxu0 %v285
        %v368 = vpop.f32.mrb[0].mxu0
        %v369 = vadd.f32 %v272, %v368
        %v370 = vpop.f32.mrb[0].mxu0
        %371 = vdwg.mxu0
        %v372 = vtanh.pop %v354
        %v373 = vtanh.pop %v359
        %v374 = vtanh.pop %v364
        %v375 = vtanh.pop %v369
        %v376 = vld [vmem:[%s3] sm:$0xff]
        %v377 = vld [vmem:[%s3 + $0x8] sm:$0xff]
        %v378 = vld [vmem:[%s4] sm:$0xff]
        %v379 = vld [vmem:[%s4 + $0x8] sm:$0xff]
        %381 = vset.pattern.permute.xlu0 0
        %382 = vperm.xlu0 %381, %v378
        %v383 = vpop.permute.xlu0 %382
        %386 = vset.pattern.permute.xlu0 0
        %387 = vperm.xlu0 %386, %v379
        %v388 = vpop.permute.xlu0 %387
        %v391 = vsel %vm274, %v376, 0
        %v394 = vsel %vm274, %v377, 0
        %396 = vmatprep.subr.mxu0 0.0
        %397 = vmatpush1.msra.mxu0 %v372
        %398 = vmatprep.subr.mxu0 0.0
        %399 = vmatpush1.msra.mxu0 %v373
        %400 = vmatprep.subr.mxu0 0.0
        %401 = vmatpush1.msra.mxu0 %v374
        %402 = vmatprep.subr.mxu0 0.0
        %403 = vmatpush1.msra.mxu0 %v375
        %404 = vmatprep.subr.mxu0 0.0
        %405 = vmatpush1.msra.mxu0 0.0
        %406 = vmatprep.subr.mxu0 0.0
        %407 = vmatpush1.msra.mxu0 0.0
        %408 = vmatprep.subr.mxu0 0.0
        %409 = vmatpush1.msra.mxu0 0.0
        %410 = vmatprep.subr.mxu0 0.0
        %411 = vmatpush1.msra.mxu0 0.0
        %412 = vmatprep.subr.mxu0 0.0
        %413 = vmatpush1.msra.mxu0 0.0
        %414 = vmatprep.subr.mxu0 0.0
        %415 = vmatpush1.msra.mxu0 0.0
        %416 = vmatprep.subr.mxu0 0.0
        %417 = vmatpush1.msra.mxu0 0.0
        %418 = vmatprep.subr.mxu0 0.0
        %419 = vmatpush1.msra.mxu0 0.0
        %420 = vmatprep.subr.mxu0 0.0
        %421 = vmatpush1.msra.mxu0 0.0
        %422 = vmatprep.subr.mxu0 0.0
        %423 = vmatpush1.msra.mxu0 0.0
        %424 = vmatprep.subr.mxu0 0.0
        %425 = vmatpush1.msra.mxu0 0.0
        %426 = vmatprep.subr.mxu0 0.0
        %427 = vmatpush1.msra.mxu0 0.0
        %428 = vmatprep.subr.mxu0 0.0
        %429 = vmatpush1.msra.mxu0 0.0
        %430 = vmatprep.subr.mxu0 0.0
        %431 = vmatpush1.msra.mxu0 0.0
        %432 = vmatprep.subr.mxu0 0.0
        %433 = vmatpush1.msra.mxu0 0.0
        %434 = vmatprep.subr.mxu0 0.0
        %435 = vmatpush1.msra.mxu0 0.0
        %436 = vmatprep.subr.mxu0 0.0
        %437 = vmatpush1.msra.mxu0 0.0
        %438 = vmatprep.subr.mxu0 0.0
        %439 = vmatpush1.msra.mxu0 0.0
        %440 = vmatprep.subr.mxu0 0.0
        %441 = vmatpush1.msra.mxu0 0.0
        %442 = vmatprep.subr.mxu0 0.0
        %443 = vmatpush1.msra.mxu0 0.0
        %444 = vmatprep.subr.mxu0 0.0
        %445 = vmatpush1.msra.mxu0 0.0
        %446 = vmatprep.subr.mxu0 0.0
        %447 = vmatpush1.msra.mxu0 0.0
        %448 = vmatprep.subr.mxu0 0.0
        %449 = vmatpush1.msra.mxu0 0.0
        %450 = vmatprep.subr.mxu0 0.0
        %451 = vmatpush1.msra.mxu0 0.0
        %452 = vmatprep.subr.mxu0 0.0
        %453 = vmatpush1.msra.mxu0 0.0
        %454 = vmatprep.subr.mxu0 0.0
        %455 = vmatpush1.msra.mxu0 0.0
        %456 = vmatprep.subr.mxu0 0.0
        %457 = vmatpush1.msra.mxu0 0.0
        %458 = vmatprep.subr.mxu0 0.0
        %459 = vmatpush1.msra.mxu0 0.0
        %460 = vmatprep.mubr.f32.mxu0 0.0
        %461 = vmatmul.mubr.f32.gmra.mrb[0].mxu0 %v391
        %v462 = vpop.f32.mrb[0].mxu0
        %v463 = vadd.f32 %v383, %v462
        %v464 = vpop.f32.mrb[0].mxu0
        %465 = vmatprep.mubr.f32.mxu0 0.0
        %466 = vmatmul.mubr.f32.gmra.mrb[0].mxu0 %v394
        %v467 = vpop.f32.mrb[0].mxu0
        %v468 = vadd.f32 %v388, %v467
        %v469 = vpop.f32.mrb[0].mxu0
        %470 = vdwg.mxu0
        %v471 = vtanh.pop %v463
        %v472 = vtanh.pop %v468
        %473 = vst [vmem:[%s241] sm:$0xff] %v471
        %474 = vst [vmem:[%s241 + $0x8] sm:$0xff] %v472
        %s475 = sand.u32 %s140, 1
        %s476 = scalar_lea.sflag [#allocation4], %s475
        %s477 = sand.u32 %s140, 1
        %s478 = smul.addr %s477, 16
        %s479 = scalar_lea.vmem [#allocation5], %s478
        // Predicated region
        $region45: #{module3_forward.1} parent=39 // pred_check
          %p480 = pneg %p150
        $region46: #{module3_forward.1} parent=39 // pred_check_branch
          %482 = sbr.rel (%p480) target = $region48
        $region47: #{module3_forward.1} parent=39 // pred_region
          %s484 = ssub.s32 256, 256
          %485 = vsyncadd %s476, %s484
          %s486 = smul.addr %s22, 128
          %s487 = scalar_lea.hbm %s5, %s486
          %s488 = sshll.u32 %s479, 4
          %s489 = int_to_ptr.vmem [resolvable:$true] %s488
          %494 = dma.vmem_to_hbm [thread:$0]  %s489, 256, %s487, %s476, 128, 256, 8
        $region48: #{module3_forward.1} parent=39 // pred_fallthru
          _
      $region40: #{module3_forward.1} parent=5 // pred_fallthru
        _
      %p495 = scmp.le.s32.totalorder 2, %s17
      // Predicated region
      $region49: #{module3_forward.1} parent=5 // pred_check
        %p496 = pneg %p495
      $region50: #{module3_forward.1} parent=5 // pred_check_branch
        %498 = sbr.rel (%p496) target = $region52
      $region51: #{module3_forward.1} parent=5 // pred_region
        %s499 = ssub.s32 %s17, 2
        // Predicated region
        $region53: #{module3_forward.1} parent=51 // pred_check
          %p500 = pneg %p156
        $region54: #{module3_forward.1} parent=51 // pred_check_branch
          %502 = sbr.rel (%p500) target = $region56
        $region55: #{module3_forward.1} parent=51 // pred_region
          %s503 = sand.u32 %s141, 1
          %s504 = scalar_lea.sflag [#allocation4], %s503
          %s505 = sand.u32 %s141, 1
          %s506 = smul.addr %s505, 16
          %s507 = scalar_lea.vmem [#allocation5], %s506
          %508 = dma.done %s504, 256
        $region56: #{module3_forward.1} parent=51 // pred_fallthru
          _
      $region52: #{module3_forward.1} parent=5 // pred_fallthru
        _
    $region6: #{module3_forward.1} parent=1 // loop_footer
      %s21 = sadd.s32 1, %s17
    $region7: #{module3_forward.1} parent=1 // loop_footer_branch
      %16 = sbr.rel target = $region3
    $region8: #{module3_forward.1} parent=1 // loop_exit
      _
    %509 = vsyncpa [#allocation3], 1
    %s510 = scalar_lea.sflag [#allocation3], 1
    %511 = vsyncpa %s510, 1
    %512 = vsyncpa [#allocation4], 1
    %s513 = scalar_lea.sflag [#allocation4], 1
    %514 = vsyncpa %s513, 1

</llo_original>
